<compile_context>
chip_gen: v7x
topology: tpu7x:2x2x1
jax: 0.10.0
libtpu: 0.0.40
codegen_flags: <defaults>
</compile_context>

<pallas_src>
import functools

import jax
import jax.numpy as jnp
from jax.experimental import pallas as pl
from jax.experimental.pallas import tpu as pltpu


def grn_kernel(tokens_ref, g_ref, w_ref, bias_ref, out_ref, acc_ref,
               *, eps, num_outputs):
    # tokens_ref: (tm, D)  [Y squeezed out by BlockSpec]
    # g_ref: (1, D)   w_ref: (O, D)   bias_ref: (O, Y) in SMEM
    # out_ref: (O, tm, D)   acc_ref: (O, tm, D) f32 scratch
    y = pl.program_id(1)

    @pl.when(y == 0)
    def _init():
        acc_ref[...] = jnp.zeros_like(acc_ref)

    x = tokens_ref[...].astype(jnp.float32)                  # (tm, D)
    g = g_ref[...].astype(jnp.float32)                       # (1, D)
    w = w_ref[...].astype(jnp.float32)                       # (O, D)

    # RMSNorm over the feature dim (torch.nn.RMSNorm, eps = finfo(dtype).eps).
    ms = jnp.mean(x * x, axis=-1, keepdims=True)             # (tm, 1)
    normed = x * jax.lax.rsqrt(ms + eps) * g                 # (tm, D)

    # Linear(dim -> num_outputs, bias=False) + bias + relu + weighted sum.
    # num_outputs is tiny & static: a cross-lane reduction per output head
    # beats a degenerate O-column MXU matmul on this mem-bound kernel.
    for o in range(num_outputs):
        s = jnp.sum(normed * w[o:o + 1, :], axis=-1, keepdims=True)   # (tm, 1)
        a = jnp.maximum(s + bias_ref[o, y], 0.0)                      # (tm, 1)
        acc_ref[o, :, :] = acc_ref[o, :, :] + x * a                   # f32 acc

    @pl.when(y == pl.num_programs(1) - 1)
    def _finalize():
        out_ref[...] = acc_ref[...].astype(out_ref.dtype)


def _pick_tile(M, D, O, itemsize, *, budget_bytes=24 * 1024 * 1024,
               max_tile=2048):
    """Largest multiple-of-8 tile dividing M that fits a conservative VMEM
    budget (double-buffered blocks + f32 scratch + temporaries), preferring
    >= 2 grid steps along M so v7x's two TensorCores both get work."""
    def footprint(t):
        b = 2 * t * D * itemsize          # tokens block, double-buffered
        b += 2 * O * t * D * itemsize     # output block, double-buffered
        b += O * t * D * 4                # f32 accumulator scratch
        b += 4 * t * D * 4                # in-kernel f32 temporaries
        return b

    cands = [t for t in range(8, min(M, max_tile) + 1, 8) if M % t == 0]
    if not cands:
        return M                          # tiny/awkward M: single full tile
    fitting = [t for t in cands if footprint(t) <= budget_bytes]
    if not fitting:
        return cands[0]
    multi_step = [t for t in fitting if M // t >= 2]
    return max(multi_step) if multi_step else max(fitting)


def grn_forward(tokens, rms_weight, lin_weight, bias, *, tm=None,
                interpret=False):
    """tokens: (Y, B, N, D); rms_weight: (D,); lin_weight: (O, D); bias: (O, Y)."""
    Y, B, N, D = tokens.shape
    O = lin_weight.shape[0]
    M = B * N
    itemsize = jnp.dtype(tokens.dtype).itemsize
    # torch.nn.RMSNorm(eps=None) uses finfo(input.dtype).eps
    eps = float(jnp.finfo(tokens.dtype).eps)

    if tm is None:
        tm = _pick_tile(M, D, O, itemsize)
    assert M % tm == 0, "tile must divide B*N"

    x = tokens.reshape(Y, M, D)
    g2 = rms_weight.reshape(1, D)
    bias_f32 = bias.astype(jnp.float32)              # (O, Y), read as scalars

    cost = pl.CostEstimate(
        flops=int(Y * M * (4 * D + O * (3 * D + 2))),
        transcendentals=int(Y * M),
        bytes_accessed=int((Y + O) * M * D * itemsize),
    )

    out = pl.pallas_call(
        functools.partial(grn_kernel, eps=eps, num_outputs=O),
        out_shape=jax.ShapeDtypeStruct((O, M, D), tokens.dtype),
        grid_spec=pltpu.PrefetchScalarGridSpec(
            num_scalar_prefetch=0,
            grid=(M // tm, Y),
            in_specs=[
                # tokens tile for the current layer y (Y dim squeezed out)
                pl.BlockSpec((None, tm, D), lambda i, y: (y, i, 0)),
                pl.BlockSpec((1, D), lambda i, y: (0, 0)),     # RMSNorm gain
                pl.BlockSpec((O, D), lambda i, y: (0, 0)),     # Linear weight
                pl.BlockSpec(memory_space=pltpu.MemorySpace.SMEM),  # bias
            ],
            out_specs=pl.BlockSpec((O, tm, D), lambda i, y: (0, i, 0)),
            scratch_shapes=[pltpu.VMEM((O, tm, D), jnp.float32)],
        ),
        compiler_params=pltpu.CompilerParams(
            dimension_semantics=("parallel", "arbitrary"),
            vmem_limit_bytes=48 * 1024 * 1024,   # > scoped default, < v7x phys
        ),
        cost_estimate=cost,
        interpret=interpret,
    )(x, g2, lin_weight, bias_f32)

    out = out.reshape(O, B, N, D)
    if O == 1:
        out = out[0]                                 # rearrange('1 ... -> ...')
    return out


def grn_reference(tokens, rms_weight, lin_weight, bias):
    """Pure-JAX reference mirroring the PyTorch forward."""
    eps = jnp.finfo(tokens.dtype).eps
    x = tokens.astype(jnp.float32)
    normed = x * jax.lax.rsqrt(jnp.mean(x * x, -1, keepdims=True) + eps)
    normed = normed * rms_weight
    agg = jnp.einsum('ybnd,od->oybn', normed, lin_weight)      # (O, Y, B, N)
    agg = jax.nn.relu(agg + bias[:, :, None, None])
    out = jnp.einsum('ybnd,oybn->obnd', x, agg)
    if lin_weight.shape[0] == 1:
        out = out[0]
    return out


if __name__ == "__main__":
    # Small shapes consistent with the module: Y layers of (B, N, D) tokens.
    # D chosen as a multiple of 128 for lane-dense (unmasked) stores.
    Y, B, N, D = 4, 2, 64, 128
    key = jax.random.PRNGKey(0)
    k_tok, k_w = jax.random.split(key)
    tokens = jax.random.normal(k_tok, (Y, B, N, D), dtype=jnp.float32)

    # --- Parameters exactly as the module's __init__ builds them (O = 1) ---
    O = 1
    rms_weight = jnp.ones((D,), dtype=jnp.float32)             # RMSNorm gain
    lin_weight = jnp.zeros((O, D), dtype=jnp.float32)          # zero-init Linear
    bias = jnp.zeros((O, Y), dtype=jnp.float32).at[:, -1].set(1.0)

    out = grn_forward(tokens, rms_weight, lin_weight, bias)
    jax.block_until_ready(out)
    assert out.shape == (B, N, D)
    ref = grn_reference(tokens, rms_weight, lin_weight, bias)
    assert jnp.allclose(out, ref, atol=1e-5, rtol=1e-5)

    # Non-trivial deterministic weights + multi-output path (O = 2).
    O2 = 2
    lin_weight2 = 0.05 * jax.random.normal(k_w, (O2, D), dtype=jnp.float32)
    bias2 = jnp.linspace(-0.5, 1.0, O2 * Y, dtype=jnp.float32).reshape(O2, Y)
    out2 = grn_forward(tokens, rms_weight, lin_weight2, bias2)
    jax.block_until_ready(out2)
    ref2 = grn_reference(tokens, rms_weight, lin_weight2, bias2)
    assert out2.shape == (O2, B, N, D)
    assert jnp.allclose(out2, ref2, atol=1e-4, rtol=1e-4)

    print("KERNEL_OK")
</pallas_src>

<mosaic_0001>
module attributes {stable_mosaic.version = 11 : i64} {
  func.func @grn_kernel(%arg0: i32, %arg1: i32, %arg2: memref<1x64x128xf32, #tpu.memory_space<vmem>>, %arg3: memref<1x128xf32, #tpu.memory_space<vmem>>, %arg4: memref<1x128xf32, #tpu.memory_space<vmem>>, %arg5: memref<1x4xf32, #tpu.memory_space<smem>>, %arg6: memref<1x64x128xf32, #tpu.memory_space<vmem>>, %arg7: memref<1x64x128xf32, #tpu.memory_space<vmem>>) attributes {dimension_semantics = [#tpu.dimension_semantics<parallel>, #tpu.dimension_semantics<arbitrary>], iteration_bounds = array<i64: 2, 4>, scalar_prefetch = 0 : i64, scratch_operands = 1 : i64, tpu.core_type = #tpu.core_type<tc>, window_params = [{transform_indices = @transform_0, window_bounds = array<i64: 1, 64, 128>}, {pipeline_mode = #tpu.pipeline_mode<synchronous>, transform_indices = @transform_1, window_bounds = array<i64: 1, 128>}, {pipeline_mode = #tpu.pipeline_mode<synchronous>, transform_indices = @transform_2, window_bounds = array<i64: 1, 128>}, {transform_indices = @transform_3, window_bounds = array<i64: 1, 4>}, {transform_indices = @transform_4, window_bounds = array<i64: 1, 64, 128>}]} {
    %c0_i32 = arith.constant 0 : i32
    %0 = arith.cmpi eq, %arg1, %c0_i32 : i32
    %1 = arith.extui %0 : i1 to i32
    %c0_i32_0 = arith.constant 0 : i32
    %2 = arith.cmpi ne, %1, %c0_i32_0 : i32
    scf.if %2 {
      %cst_19 = arith.constant 0.000000e+00 : f32
      %40 = vector.broadcast %cst_19 : f32 to vector<1x64x128xf32>
      %c0_20 = arith.constant 0 : index
      %c0_21 = arith.constant 0 : index
      %c0_22 = arith.constant 0 : index
      %41 = vector.load %arg7[%c0_20, %c0_21, %c0_22] : memref<1x64x128xf32, #tpu.memory_space<vmem>>, vector<1x64x128xf32>
      tpu.vector_store %arg7[%c0_20, %c0_21, %c0_22], %40 {strides = array<i32>} : memref<1x64x128xf32, #tpu.memory_space<vmem>>, vector<1x64x128xf32>,
    } else {
    }
    %c0 = arith.constant 0 : index
    %c0_1 = arith.constant 0 : index
    %c0_2 = arith.constant 0 : index
    %3 = vector.load %arg2[%c0, %c0_1, %c0_2] : memref<1x64x128xf32, #tpu.memory_space<vmem>>, vector<1x64x128xf32>
    %4 = vector.shape_cast %3 : vector<1x64x128xf32> to vector<64x128xf32>
    %c0_3 = arith.constant 0 : index
    %c0_4 = arith.constant 0 : index
    %5 = vector.load %arg3[%c0_3, %c0_4] : memref<1x128xf32, #tpu.memory_space<vmem>>, vector<1x128xf32>
    %c0_5 = arith.constant 0 : index
    %c0_6 = arith.constant 0 : index
    %6 = vector.load %arg4[%c0_5, %c0_6] : memref<1x128xf32, #tpu.memory_space<vmem>>, vector<1x128xf32>
    %7 = arith.mulf %4, %4 : vector<64x128xf32>
    %cst = arith.constant dense<0.000000e+00> : vector<64xf32>
    %8 = vector.multi_reduction <add>, %7, %cst [1] : vector<64x128xf32> to vector<64xf32>
    %9 = vector.shape_cast %8 : vector<64xf32> to vector<64x1xf32>
    %cst_7 = arith.constant 1.280000e+02 : f32
    %10 = vector.broadcast %cst_7 : f32 to vector<64x1xf32>
    %11 = arith.divf %9, %10 : vector<64x1xf32>
    %cst_8 = arith.constant 1.1920929E-7 : f32
    %12 = vector.broadcast %cst_8 : f32 to vector<64x1xf32>
    %13 = arith.addf %11, %12 : vector<64x1xf32>
    %14 = math.rsqrt %13 : vector<64x1xf32>
    %15 = vector.broadcast %14 : vector<64x1xf32> to vector<64x128xf32>
    %16 = arith.mulf %4, %15 : vector<64x128xf32>
    %17 = vector.broadcast %5 : vector<1x128xf32> to vector<64x128xf32>
    %18 = arith.mulf %16, %17 : vector<64x128xf32>
    %19 = vector.broadcast %6 : vector<1x128xf32> to vector<64x128xf32>
    %20 = arith.mulf %18, %19 : vector<64x128xf32>
    %cst_9 = arith.constant dense<0.000000e+00> : vector<64xf32>
    %21 = vector.multi_reduction <add>, %20, %cst_9 [1] : vector<64x128xf32> to vector<64xf32>
    %22 = vector.shape_cast %21 : vector<64xf32> to vector<64x1xf32>
    %c0_10 = arith.constant 0 : index
    %23 = arith.index_cast %arg1 : i32 to index
    %24 = memref.load %arg5[%c0_10, %23] : memref<1x4xf32, #tpu.memory_space<smem>>
    %25 = vector.broadcast %24 : f32 to vector<64x1xf32>
    %26 = arith.addf %22, %25 : vector<64x1xf32>
    %cst_11 = arith.constant 0.000000e+00 : f32
    %27 = vector.broadcast %cst_11 : f32 to vector<64x1xf32>
    %28 = arith.maximumf %26, %27 : vector<64x1xf32>
    %c0_12 = arith.constant 0 : index
    %c0_13 = arith.constant 0 : index
    %c0_14 = arith.constant 0 : index
    %29 = vector.load %arg7[%c0_12, %c0_13, %c0_14] : memref<1x64x128xf32, #tpu.memory_space<vmem>>, vector<1x64x128xf32>
    %30 = vector.shape_cast %29 : vector<1x64x128xf32> to vector<64x128xf32>
    %31 = vector.broadcast %28 : vector<64x1xf32> to vector<64x128xf32>
    %32 = arith.mulf %4, %31 : vector<64x128xf32>
    %33 = arith.addf %30, %32 : vector<64x128xf32>
    %c0_15 = arith.constant 0 : index
    %c0_16 = arith.constant 0 : index
    %c0_17 = arith.constant 0 : index
    %34 = vector.load %arg7[%c0_15, %c0_16, %c0_17] : memref<1x64x128xf32, #tpu.memory_space<vmem>>, vector<1x64x128xf32>
    %35 = vector.shape_cast %34 : vector<1x64x128xf32> to vector<64x128xf32>
    %36 = vector.shape_cast %33 : vector<64x128xf32> to vector<1x64x128xf32>
    tpu.vector_store %arg7[%c0_15, %c0_16, %c0_17], %36 {strides = array<i32>} : memref<1x64x128xf32, #tpu.memory_space<vmem>>, vector<1x64x128xf32>,
    %c3_i32 = arith.constant 3 : i32
    %37 = arith.cmpi eq, %arg1, %c3_i32 : i32
    %38 = arith.extui %37 : i1 to i32
    %c0_i32_18 = arith.constant 0 : i32
    %39 = arith.cmpi ne, %38, %c0_i32_18 : i32
    scf.if %39 {
      %c0_19 = arith.constant 0 : index
      %c0_20 = arith.constant 0 : index
      %c0_21 = arith.constant 0 : index
      %40 = vector.load %arg7[%c0_19, %c0_20, %c0_21] : memref<1x64x128xf32, #tpu.memory_space<vmem>>, vector<1x64x128xf32>
      %c0_22 = arith.constant 0 : index
      %c0_23 = arith.constant 0 : index
      %c0_24 = arith.constant 0 : index
      %41 = vector.load %arg6[%c0_22, %c0_23, %c0_24] : memref<1x64x128xf32, #tpu.memory_space<vmem>>, vector<1x64x128xf32>
      tpu.vector_store %arg6[%c0_22, %c0_23, %c0_24], %40 {strides = array<i32>} : memref<1x64x128xf32, #tpu.memory_space<vmem>>, vector<1x64x128xf32>,
    } else {
    }
    return
  }
  func.func @transform_0(%arg0: i32, %arg1: i32) -> (i32, i32, i32) {
    %c0_i32 = arith.constant 0 : i32
    %c0_i32_0 = arith.constant 0 : i32
    return %arg1, %arg0, %c0_i32 : i32, i32, i32
  }
  func.func @transform_1(%arg0: i32, %arg1: i32) -> (i32, i32) {
    %c0_i32 = arith.constant 0 : i32
    %c0_i32_0 = arith.constant 0 : i32
    %c0_i32_1 = arith.constant 0 : i32
    return %c0_i32, %c0_i32_0 : i32, i32
  }
  func.func @transform_2(%arg0: i32, %arg1: i32) -> (i32, i32) {
    %c0_i32 = arith.constant 0 : i32
    %c0_i32_0 = arith.constant 0 : i32
    %c0_i32_1 = arith.constant 0 : i32
    return %c0_i32, %c0_i32_0 : i32, i32
  }
  func.func @transform_3(%arg0: i32, %arg1: i32) -> (i32, i32) {
    %c0_i32 = arith.constant 0 : i32
    %c0_i32_0 = arith.constant 0 : i32
    %c0_i32_1 = arith.constant 0 : i32
    return %c0_i32, %c0_i32_0 : i32, i32
  }
  func.func @transform_4(%arg0: i32, %arg1: i32) -> (i32, i32, i32) {
    %c0_i32 = arith.constant 0 : i32
    %c0_i32_0 = arith.constant 0 : i32
    %c0_i32_1 = arith.constant 0 : i32
    return %c0_i32, %arg0, %c0_i32_0 : i32, i32, i32
  }
}

</mosaic_0001>

<llo_original>
// kernel: tpu_custom_call.1
$region0: #{tpu_custom_call.1}
  #allocation0 [shape = 'u32[]', space=smem, size = 0x4, offset = 0x4, fixed_abs, tag = 'smem constant byte address 0x4 - core index']
  #allocation1 [shape = 'u32[144,128]{1,0:T(1,128)}', space=vmem, size = 0x12000, scoped, tag = 'internal scratch']
  #allocation2 [shape = 'f32[1,64,128]{2,1,0:T(8,128)}', space=vmem, size = 0x8000, scoped, tag = 'scratch operand']
  %s0 = inlined_call_operand.hbm [shape: f32[4,128,128], index: 0, kind: input, shape index: {}]
  %s1 = inlined_call_operand.vmem [shape: f32[1,128], index: 1, kind: input, shape index: {}]
  %s2 = inlined_call_operand.vmem [shape: f32[1,128], index: 2, kind: input, shape index: {}]
  %s3 = inlined_call_operand.vmem [shape: f32[1,4], index: 3, kind: input, shape index: {}]
  %s4 = inlined_call_operand.hbm [shape: f32[1,128,128], index: 4, kind: output, shape index: {}]
  %s5 = sld [smem:[#allocation0]]
  $region65: #{tpu_custom_call.1} parent=0
    _
  %s7 = ssub.s32 1, %s5
  %s8 = scalar_select 0, %s7, %s5
  $region1: #{tpu_custom_call.1} parent=0
    #allocation3 [shape = 'u8[65536]{0}', space=vmem, size = 0x10000, scoped, tag = 'input window, operand 0']
    #allocation4 [shape = 's32[2]{0}', space=sflag, size = 0x8, scoped, tag = 'scoped memory for tpu_custom_call.1']
    #allocation5 [shape = 's32[2]{0}', space=sflag, size = 0x8, scoped, tag = 'scoped memory for tpu_custom_call.1']
    #allocation6 [shape = 's32[2]{0}', space=sflag, size = 0x8, scoped, tag = 'scoped memory for tpu_custom_call.1']
    #allocation7 [shape = 'u8[512]{0}', space=smem, size = 0x200, scoped, tag = 'input window, operand 3, single buffered']
    #allocation8 [shape = 'u8[65536]{0}', space=vmem, size = 0x10000, scoped, tag = 'output window, operand 0']
    %9 = vsyncpa [#allocation4], 0
    %s10 = scalar_lea.sflag [#allocation4], 1
    %11 = vsyncpa %s10, 0
    %12 = vsyncpa [#allocation6], 0
    %13 = vsyncpa [#allocation5], 0
    %s14 = scalar_lea.sflag [#allocation5], 1
    %15 = vsyncpa %s14, 0
    loop: start=0, step=1, limit=10
    $region2: #{tpu_custom_call.1} parent=1 // loop_pre_header
      _
    $region3: #{tpu_custom_call.1} parent=1 // loop_header
      %s17 = sphi 0, %s21
      %p18 = scmp.ge.s32.totalorder %s17, 10
      %s24 = sphi 0, %s36
      %s25 = sphi 0, %s32
      %s26 = sphi 0, %s24
      %s27 = sphi 0, %s25
      %s28 = sphi 0, %s26
      %s29 = sphi 0, %s27
      %s41 = sphi 0, %s43
      %s44 = sphi 0, %s41
      %s45 = sphi 0, %s44
      %s61 = sphi 0, %s45
      %s65 = sphi 0, %s65
      %s67 = sphi 0, %s65
      %s68 = sphi 0, %s67
      %s82 = sphi 0, %s68
      %s86 = sphi 0, %s86
      %s88 = sphi 0, %s86
      %s89 = sphi 0, %s88
      %s103 = sphi 0, %s89
      %s107 = sphi 0, %s107
      %s109 = sphi 0, %s107
      %s110 = sphi 0, %s109
      %s124 = sphi 0, %s110
      %s130 = sphi 0, %s132
      %s133 = sphi 0, %s130
      %s134 = sphi 0, %s133
      %s150 = sphi 0, %s134
    $region4: #{tpu_custom_call.1} parent=1 // loop_header_branch
      %20 = sbr.rel (%p18) target = $region8
    $region5: #{tpu_custom_call.1} parent=1 // loop_body
      %s22 = ssub.s32 %s17, 1
      %s23 = ssub.s32 %s17, 2
      %s30 = sadd.s32 1, %s25
      %p31 = scmp.ge.s32.totalorder %s30, 4
      %s32 = scalar_select %p31, 0, %s30
      %s33 = sadd.s32 1, %s24
      %s34 = scalar_select %p31, %s33, %s24
      %p35 = scmp.ge.s32.totalorder %s34, 2
      %s36 = scalar_select %p35, 0, %s34
      %s37 = ssub.s32 %s25, %s32
      %s38 = ssub.s32 %s24, %s36
      %s39 = sor.u32 %s37, %s38
      %p40 = scmp.eq.s32.totalorder %s39, 0
      %s42 = sadd.s32 %s41, 1
      %s43 = scalar_select %p40, %s41, %s42
      %p46 = pneg %p40
      %p47 = scmp.eq.s32.totalorder %s17, 7
      %p48 = por %p46, %p47
      %p49 = scmp.ne.s32.totalorder %s41, %s44
      %p50 = scmp.eq.s32.totalorder %s17, 0
      %p51 = por %p49, %p50
      %p52 = scmp.ne.s32.totalorder %s41, %s44
      %p53 = scmp.eq.s32.totalorder %s22, 7
      %p54 = por %p52, %p53
      %p55 = scmp.ne.s32.totalorder %s44, %s45
      %p56 = scmp.eq.s32.totalorder %s22, 0
      %p57 = por %p55, %p56
      %p58 = scmp.ne.s32.totalorder %s44, %s45
      %p59 = scmp.eq.s32.totalorder %s23, 7
      %p60 = por %p58, %p59
      %p62 = scmp.ne.s32.totalorder %s45, %s61
      %p63 = scmp.eq.s32.totalorder %s23, 0
      %p64 = por %p62, %p63
      %s66 = sadd.s32 %s65, 1
      %p69 = scmp.eq.s32.totalorder %s17, 7
      %p70 = scmp.ne.s32.totalorder %s65, %s67
      %p71 = scmp.eq.s32.totalorder %s17, 0
      %p72 = por %p70, %p71
      %p73 = scmp.ne.s32.totalorder %s65, %s67
      %p74 = scmp.eq.s32.totalorder %s22, 7
      %p75 = por %p73, %p74
      %p76 = scmp.ne.s32.totalorder %s67, %s68
      %p77 = scmp.eq.s32.totalorder %s22, 0
      %p78 = por %p76, %p77
      %p79 = scmp.ne.s32.totalorder %s67, %s68
      %p80 = scmp.eq.s32.totalorder %s23, 7
      %p81 = por %p79, %p80
      %p83 = scmp.ne.s32.totalorder %s68, %s82
      %p84 = scmp.eq.s32.totalorder %s23, 0
      %p85 = por %p83, %p84
      %s87 = sadd.s32 %s86, 1
      %p90 = scmp.eq.s32.totalorder %s17, 7
      %p91 = scmp.ne.s32.totalorder %s86, %s88
      %p92 = scmp.eq.s32.totalorder %s17, 0
      %p93 = por %p91, %p92
      %p94 = scmp.ne.s32.totalorder %s86, %s88
      %p95 = scmp.eq.s32.totalorder %s22, 7
      %p96 = por %p94, %p95
      %p97 = scmp.ne.s32.totalorder %s88, %s89
      %p98 = scmp.eq.s32.totalorder %s22, 0
      %p99 = por %p97, %p98
      %p100 = scmp.ne.s32.totalorder %s88, %s89
      %p101 = scmp.eq.s32.totalorder %s23, 7
      %p102 = por %p100, %p101
      %p104 = scmp.ne.s32.totalorder %s89, %s103
      %p105 = scmp.eq.s32.totalorder %s23, 0
      %p106 = por %p104, %p105
      %s108 = sadd.s32 %s107, 1
      %p111 = scmp.eq.s32.totalorder %s17, 7
      %p112 = scmp.ne.s32.totalorder %s107, %s109
      %p113 = scmp.eq.s32.totalorder %s17, 0
      %p114 = por %p112, %p113
      %p115 = scmp.ne.s32.totalorder %s107, %s109
      %p116 = scmp.eq.s32.totalorder %s22, 7
      %p117 = por %p115, %p116
      %p118 = scmp.ne.s32.totalorder %s109, %s110
      %p119 = scmp.eq.s32.totalorder %s22, 0
      %p120 = por %p118, %p119
      %p121 = scmp.ne.s32.totalorder %s109, %s110
      %p122 = scmp.eq.s32.totalorder %s23, 7
      %p123 = por %p121, %p122
      %p125 = scmp.ne.s32.totalorder %s110, %s124
      %p126 = scmp.eq.s32.totalorder %s23, 0
      %p127 = por %p125, %p126
      %s128 = ssub.s32 %s24, %s36
      %p129 = scmp.eq.s32.totalorder %s128, 0
      %s131 = sadd.s32 %s130, 1
      %s132 = scalar_select %p129, %s130, %s131
      %p135 = pneg %p129
      %p136 = scmp.eq.s32.totalorder %s17, 7
      %p137 = por %p135, %p136
      %p138 = scmp.ne.s32.totalorder %s130, %s133
      %p139 = scmp.eq.s32.totalorder %s17, 0
      %p140 = por %p138, %p139
      %p141 = scmp.ne.s32.totalorder %s130, %s133
      %p142 = scmp.eq.s32.totalorder %s22, 7
      %p143 = por %p141, %p142
      %p144 = scmp.ne.s32.totalorder %s133, %s134
      %p145 = scmp.eq.s32.totalorder %s22, 0
      %p146 = por %p144, %p145
      %p147 = scmp.ne.s32.totalorder %s133, %s134
      %p148 = scmp.eq.s32.totalorder %s23, 7
      %p149 = por %p147, %p148
      %p151 = scmp.ne.s32.totalorder %s134, %s150
      %p152 = scmp.eq.s32.totalorder %s23, 0
      %p153 = por %p151, %p152
      %p154 = scmp.le.s32.totalorder 1, %s17
      %p155 = scmp.lt.s32.totalorder %s17, 9
      %p156 = pnand %p154, %p155
      %p157 = pneg %p156
      // Predicated region
      $region9: #{tpu_custom_call.1} parent=5 // pred_check
        _
      $region10: #{tpu_custom_call.1} parent=5 // pred_check_branch
        %159 = sbr.rel (%p156) target = $region12
      $region11: #{tpu_custom_call.1} parent=5 // pred_region
        %s160 = ssub.s32 %s17, 1
        // Predicated region
        $region13: #{tpu_custom_call.1} parent=11 // pred_check
          %p161 = pneg %p78
        $region14: #{tpu_custom_call.1} parent=11 // pred_check_branch
          %163 = sbr.rel (%p161) target = $region16
        $region15: #{tpu_custom_call.1} parent=11 // pred_region
          _
        $region16: #{tpu_custom_call.1} parent=11 // pred_fallthru
          _
        // Predicated region
        $region17: #{tpu_custom_call.1} parent=11 // pred_check
          %p164 = pneg %p99
        $region18: #{tpu_custom_call.1} parent=11 // pred_check_branch
          %166 = sbr.rel (%p164) target = $region20
        $region19: #{tpu_custom_call.1} parent=11 // pred_region
          _
        $region20: #{tpu_custom_call.1} parent=11 // pred_fallthru
          _
        // Predicated region
        $region21: #{tpu_custom_call.1} parent=11 // pred_check
          %p167 = pneg %p120
        $region22: #{tpu_custom_call.1} parent=11 // pred_check_branch
          %169 = sbr.rel (%p167) target = $region24
        $region23: #{tpu_custom_call.1} parent=11 // pred_region
          %s171 = ssub.s32 16, 16
          %172 = vsyncadd [#allocation6], %s171
          %s174 = sshll.u32 %s3, 4
          %s175 = int_to_ptr.vmem [resolvable:$true] %s174
          %177 = dma.vmem_to_smem %s175, 16, [#allocation7], [#allocation6]
        $region24: #{tpu_custom_call.1} parent=11 // pred_fallthru
          _
      $region12: #{tpu_custom_call.1} parent=5 // pred_fallthru
        _
      %p178 = scmp.lt.s32.totalorder %s17, 8
      // Predicated region
      $region25: #{tpu_custom_call.1} parent=5 // pred_check
        %p179 = pneg %p178
      $region26: #{tpu_custom_call.1} parent=5 // pred_check_branch
        %181 = sbr.rel (%p179) target = $region28
      $region27: #{tpu_custom_call.1} parent=5 // pred_region
        // Predicated region
        $region29: #{tpu_custom_call.1} parent=27 // pred_check
          %p182 = pneg %p51
        $region30: #{tpu_custom_call.1} parent=27 // pred_check_branch
          %184 = sbr.rel (%p182) target = $region32
        $region31: #{tpu_custom_call.1} parent=27 // pred_region
          %s185 = sand.u32 %s41, 1
          %s186 = scalar_lea.sflag [#allocation4], %s185
          %s187 = sand.u32 %s41, 1
          %s188 = smul.addr %s187, 64
          %s189 = scalar_lea.vmem [#allocation3], %s188
          %s190 = smul.u32 8, %s24
          %s192 = ssub.s32 1024, 1024
          %193 = vsyncadd %s186, %s192
          %s194 = smul.addr %s25, 16
          %s195 = sadd.s32 %s190, %s194
          %s196 = smul.addr %s195, 128
          %s197 = scalar_lea.hbm %s0, %s196
          %s198 = sshll.u32 %s189, 4
          %s199 = int_to_ptr.vmem [resolvable:$true] %s198
          %204 = dma.hbm_to_vmem [thread:$0]  %s197, 1024, %s199, %s186, 128, 128, 8
        $region32: #{tpu_custom_call.1} parent=27 // pred_fallthru
          _
      $region28: #{tpu_custom_call.1} parent=5 // pred_fallthru
        _
      %p205 = scmp.le.s32.totalorder 1, %s17
      %p206 = scmp.lt.s32.totalorder %s17, 9
      %p207 = pnand %p205, %p206
      %p208 = pneg %p207
      // Predicated region
      $region33: #{tpu_custom_call.1} parent=5 // pred_check
        _
      $region34: #{tpu_custom_call.1} parent=5 // pred_check_branch
        %210 = sbr.rel (%p207) target = $region36
      $region35: #{tpu_custom_call.1} parent=5 // pred_region
        %s211 = ssub.s32 %s17, 1
        %s212 = sand.u32 %s44, 1
        %s213 = scalar_lea.sflag [#allocation4], %s212
        %s214 = sand.u32 %s44, 1
        %s215 = smul.addr %s214, 64
        %s216 = scalar_lea.vmem [#allocation3], %s215
        // Predicated region
        $region37: #{tpu_custom_call.1} parent=35 // pred_check
          %p217 = pneg %p57
        $region38: #{tpu_custom_call.1} parent=35 // pred_check_branch
          %219 = sbr.rel (%p217) target = $region40
        $region39: #{tpu_custom_call.1} parent=35 // pred_region
          %220 = dma.done %s213, 1024
        $region40: #{tpu_custom_call.1} parent=35 // pred_fallthru
          _
        // Predicated region
        $region41: #{tpu_custom_call.1} parent=35 // pred_check
          %p221 = pneg %p120
        $region42: #{tpu_custom_call.1} parent=35 // pred_check_branch
          %223 = sbr.rel (%p221) target = $region44
        $region43: #{tpu_custom_call.1} parent=35 // pred_region
          %224 = dma.done [#allocation6], 16
        $region44: #{tpu_custom_call.1} parent=35 // pred_fallthru
          _
        %225 = sfence
        %s226 = sand.u32 %s44, 1
        %s227 = scalar_lea.sflag [#allocation4], %s226
        %s228 = sand.u32 %s44, 1
        %s229 = smul.addr %s228, 64
        %s230 = scalar_lea.vmem [#allocation3], %s229
        %p231 = pneg %p57
        %p232 = pneg %p54
        %p233 = pneg %p78
        %p234 = pneg %p75
        %p235 = pneg %p99
        %p236 = pneg %p96
        %p237 = pneg %p120
        %p238 = pneg %p117
        %p239 = pneg %p146
        %p240 = pneg %p143
        %s241 = sand.u32 %s133, 1
        %s242 = scalar_lea.sflag [#allocation5], %s241
        %s243 = sand.u32 %s133, 1
        %s244 = smul.addr %s243, 64
        %s245 = scalar_lea.vmem [#allocation8], %s244
        %s246 = smul.u32 8, %s26
        %s247 = smul.u32 8, %s26
        %p248 = scmp.eq.s32.totalorder %s27, 0
        // Predicated region
        $region45: #{tpu_custom_call.1} parent=35 // pred_check
          %p249 = pneg %p248
        $region46: #{tpu_custom_call.1} parent=35 // pred_check_branch
          %251 = sbr.rel (%p249) target = $region48
        $region47: #{tpu_custom_call.1} parent=35 // pred_region
          %252 = vst [vmem:[#allocation2] sm:$0xff] 0.0
          %253 = vst [vmem:[#allocation2 + $0x8] sm:$0xff] 0.0
          %254 = vst [vmem:[#allocation2 + $0x10] sm:$0xff] 0.0
          %255 = vst [vmem:[#allocation2 + $0x18] sm:$0xff] 0.0
          %256 = vst [vmem:[#allocation2 + $0x20] sm:$0xff] 0.0
          %257 = vst [vmem:[#allocation2 + $0x28] sm:$0xff] 0.0
          %258 = vst [vmem:[#allocation2 + $0x30] sm:$0xff] 0.0
          %259 = vst [vmem:[#allocation2 + $0x38] sm:$0xff] 0.0
        $region48: #{tpu_custom_call.1} parent=35 // pred_fallthru
          _
        %v260 = vld [vmem:[%s216] sm:$0xff]
        %v261 = vld [vmem:[%s216 + $0x8] sm:$0xff]
        %v262 = vld [vmem:[%s216 + $0x10] sm:$0xff]
        %v263 = vld [vmem:[%s216 + $0x18] sm:$0xff]
        %v264 = vld [vmem:[%s216 + $0x20] sm:$0xff]
        %v265 = vld [vmem:[%s216 + $0x28] sm:$0xff]
        %v266 = vld [vmem:[%s216 + $0x30] sm:$0xff]
        %v267 = vld [vmem:[%s216 + $0x38] sm:$0xff]
        %v268 = vld [vmem:[%s1] sm:$0x1]
        %v269 = vld [vmem:[%s2] sm:$0x1]
        %v270 = vmul.f32 %v260, %v260
        %v271 = vmul.f32 %v261, %v261
        %v272 = vmul.f32 %v262, %v262
        %v273 = vmul.f32 %v263, %v263
        %v274 = vmul.f32 %v264, %v264
        %v275 = vmul.f32 %v265, %v265
        %v276 = vmul.f32 %v266, %v266
        %v277 = vmul.f32 %v267, %v267
        %278 = vadd.xlane.f32.xlu0 %v270
        %v279 = vpop.xlane.xlu0 %278
        %280 = vadd.xlane.f32.xlu0 %v271
        %v281 = vpop.xlane.xlu0 %280
        %282 = vadd.xlane.f32.xlu0 %v272
        %v283 = vpop.xlane.xlu0 %282
        %284 = vadd.xlane.f32.xlu0 %v273
        %v285 = vpop.xlane.xlu0 %284
        %286 = vadd.xlane.f32.xlu0 %v274
        %v287 = vpop.xlane.xlu0 %286
        %288 = vadd.xlane.f32.xlu0 %v275
        %v289 = vpop.xlane.xlu0 %288
        %290 = vadd.xlane.f32.xlu0 %v276
        %v291 = vpop.xlane.xlu0 %290
        %292 = vadd.xlane.f32.xlu0 %v277
        %v293 = vpop.xlane.xlu0 %292
        %v294 = vrcp.pop 128.0
        %v295 = vmul.f32 %v279, %v294
        %v296 = vmul.f32 %v281, %v294
        %v297 = vmul.f32 %v283, %v294
        %v298 = vmul.f32 %v285, %v294
        %v299 = vmul.f32 %v287, %v294
        %v300 = vmul.f32 %v289, %v294
        %v301 = vmul.f32 %v291, %v294
        %v302 = vmul.f32 %v293, %v294
        %v303 = vadd.f32 %v295, 1.1920929e-07
        %v304 = vadd.f32 %v296, 1.1920929e-07
        %v305 = vadd.f32 %v297, 1.1920929e-07
        %v306 = vadd.f32 %v298, 1.1920929e-07
        %v307 = vadd.f32 %v299, 1.1920929e-07
        %v308 = vadd.f32 %v300, 1.1920929e-07
        %v309 = vadd.f32 %v301, 1.1920929e-07
        %v310 = vadd.f32 %v302, 1.1920929e-07
        %v311 = vrsqrt.pop %v303
        %v312 = vrsqrt.pop %v304
        %v313 = vrsqrt.pop %v305
        %v314 = vrsqrt.pop %v306
        %v315 = vrsqrt.pop %v307
        %v316 = vrsqrt.pop %v308
        %v317 = vrsqrt.pop %v309
        %v318 = vrsqrt.pop %v310
        %v319 = vmul.f32 %v260, %v311
        %v320 = vmul.f32 %v261, %v312
        %v321 = vmul.f32 %v262, %v313
        %v322 = vmul.f32 %v263, %v314
        %v323 = vmul.f32 %v264, %v315
        %v324 = vmul.f32 %v265, %v316
        %v325 = vmul.f32 %v266, %v317
        %v326 = vmul.f32 %v267, %v318
        %v328 = vlaneseq
        %v329 = vshrl.u32 %v328, 7
        %v330 = vsub.s32 0, %v329
        %v331 = vrot.slane %v268, %v330
        %v333 = vmul.f32 %v319, %v331
        %v334 = vmul.f32 %v320, %v331
        %v335 = vmul.f32 %v321, %v331
        %v336 = vmul.f32 %v322, %v331
        %v337 = vmul.f32 %v323, %v331
        %v338 = vmul.f32 %v324, %v331
        %v339 = vmul.f32 %v325, %v331
        %v340 = vmul.f32 %v326, %v331
        %v342 = vlaneseq
        %v343 = vshrl.u32 %v342, 7
        %v344 = vsub.s32 0, %v343
        %v345 = vrot.slane %v269, %v344
        %v347 = vmul.f32 %v333, %v345
        %v348 = vmul.f32 %v334, %v345
        %v349 = vmul.f32 %v335, %v345
        %v350 = vmul.f32 %v336, %v345
        %v351 = vmul.f32 %v337, %v345
        %v352 = vmul.f32 %v338, %v345
        %v353 = vmul.f32 %v339, %v345
        %v354 = vmul.f32 %v340, %v345
        %355 = vadd.xlane.f32.xlu0 %v347
        %v356 = vpop.xlane.xlu0 %355
        %357 = vadd.xlane.f32.xlu0 %v348
        %v358 = vpop.xlane.xlu0 %357
        %359 = vadd.xlane.f32.xlu0 %v349
        %v360 = vpop.xlane.xlu0 %359
        %361 = vadd.xlane.f32.xlu0 %v350
        %v362 = vpop.xlane.xlu0 %361
        %363 = vadd.xlane.f32.xlu0 %v351
        %v364 = vpop.xlane.xlu0 %363
        %365 = vadd.xlane.f32.xlu0 %v352
        %v366 = vpop.xlane.xlu0 %365
        %367 = vadd.xlane.f32.xlu0 %v353
        %v368 = vpop.xlane.xlu0 %367
        %369 = vadd.xlane.f32.xlu0 %v354
        %v370 = vpop.xlane.xlu0 %369
        %s371 = sld [smem:[#allocation7 + %s27]]
        %v372 = vstv %s371
        %v373 = vadd.f32 %v356, %v372
        %v374 = vadd.f32 %v358, %v372
        %v375 = vadd.f32 %v360, %v372
        %v376 = vadd.f32 %v362, %v372
        %v377 = vadd.f32 %v364, %v372
        %v378 = vadd.f32 %v366, %v372
        %v379 = vadd.f32 %v368, %v372
        %v380 = vadd.f32 %v370, %v372
        %v381 = vmax.f32 %v373, 0.0
        %v382 = vmax.f32 %v374, 0.0
        %v383 = vmax.f32 %v375, 0.0
        %v384 = vmax.f32 %v376, 0.0
        %v385 = vmax.f32 %v377, 0.0
        %v386 = vmax.f32 %v378, 0.0
        %v387 = vmax.f32 %v379, 0.0
        %v388 = vmax.f32 %v380, 0.0
        %v389 = vld [vmem:[#allocation2] sm:$0xff]
        %v390 = vld [vmem:[#allocation2 + $0x8] sm:$0xff]
        %v391 = vld [vmem:[#allocation2 + $0x10] sm:$0xff]
        %v392 = vld [vmem:[#allocation2 + $0x18] sm:$0xff]
        %v393 = vld [vmem:[#allocation2 + $0x20] sm:$0xff]
        %v394 = vld [vmem:[#allocation2 + $0x28] sm:$0xff]
        %v395 = vld [vmem:[#allocation2 + $0x30] sm:$0xff]
        %v396 = vld [vmem:[#allocation2 + $0x38] sm:$0xff]
        %v397 = vmul.f32 %v260, %v381
        %v398 = vmul.f32 %v261, %v382
        %v399 = vmul.f32 %v262, %v383
        %v400 = vmul.f32 %v263, %v384
        %v401 = vmul.f32 %v264, %v385
        %v402 = vmul.f32 %v265, %v386
        %v403 = vmul.f32 %v266, %v387
        %v404 = vmul.f32 %v267, %v388
        %v405 = vadd.f32 %v389, %v397
        %v406 = vadd.f32 %v390, %v398
        %v407 = vadd.f32 %v391, %v399
        %v408 = vadd.f32 %v392, %v400
        %v409 = vadd.f32 %v393, %v401
        %v410 = vadd.f32 %v394, %v402
        %v411 = vadd.f32 %v395, %v403
        %v412 = vadd.f32 %v396, %v404
        %413 = vst [vmem:[#allocation2] sm:$0xff] %v405
        %414 = vst [vmem:[#allocation2 + $0x8] sm:$0xff] %v406
        %415 = vst [vmem:[#allocation2 + $0x10] sm:$0xff] %v407
        %416 = vst [vmem:[#allocation2 + $0x18] sm:$0xff] %v408
        %417 = vst [vmem:[#allocation2 + $0x20] sm:$0xff] %v409
        %418 = vst [vmem:[#allocation2 + $0x28] sm:$0xff] %v410
        %419 = vst [vmem:[#allocation2 + $0x30] sm:$0xff] %v411
        %420 = vst [vmem:[#allocation2 + $0x38] sm:$0xff] %v412
        %p421 = scmp.eq.s32.totalorder %s27, 3
        // Predicated region
        $region49: #{tpu_custom_call.1} parent=35 // pred_check
          %p422 = pneg %p421
        $region50: #{tpu_custom_call.1} parent=35 // pred_check_branch
          %424 = sbr.rel (%p422) target = $region52
        $region51: #{tpu_custom_call.1} parent=35 // pred_region
          %v425 = vld [vmem:[#allocation2] sm:$0xff]
          %v426 = vld [vmem:[#allocation2 + $0x8] sm:$0xff]
          %v427 = vld [vmem:[#allocation2 + $0x10] sm:$0xff]
          %v428 = vld [vmem:[#allocation2 + $0x18] sm:$0xff]
          %v429 = vld [vmem:[#allocation2 + $0x20] sm:$0xff]
          %v430 = vld [vmem:[#allocation2 + $0x28] sm:$0xff]
          %v431 = vld [vmem:[#allocation2 + $0x30] sm:$0xff]
          %v432 = vld [vmem:[#allocation2 + $0x38] sm:$0xff]
          %433 = vst [vmem:[%s245] sm:$0xff] %v425
          %434 = vst [vmem:[%s245 + $0x8] sm:$0xff] %v426
          %435 = vst [vmem:[%s245 + $0x10] sm:$0xff] %v427
          %436 = vst [vmem:[%s245 + $0x18] sm:$0xff] %v428
          %437 = vst [vmem:[%s245 + $0x20] sm:$0xff] %v429
          %438 = vst [vmem:[%s245 + $0x28] sm:$0xff] %v430
          %439 = vst [vmem:[%s245 + $0x30] sm:$0xff] %v431
          %440 = vst [vmem:[%s245 + $0x38] sm:$0xff] %v432
        $region52: #{tpu_custom_call.1} parent=35 // pred_fallthru
          _
        %s441 = sand.u32 %s133, 1
        %s442 = scalar_lea.sflag [#allocation5], %s441
        %s443 = sand.u32 %s133, 1
        %s444 = smul.addr %s443, 64
        %s445 = scalar_lea.vmem [#allocation8], %s444
        // Predicated region
        $region53: #{tpu_custom_call.1} parent=35 // pred_check
          %p446 = pneg %p143
        $region54: #{tpu_custom_call.1} parent=35 // pred_check_branch
          %448 = sbr.rel (%p446) target = $region56
        $region55: #{tpu_custom_call.1} parent=35 // pred_region
          %s449 = smul.u32 8, %s26
          %s451 = ssub.s32 1024, 1024
          %452 = vsyncadd %s442, %s451
          %s453 = smul.addr %s449, 128
          %s454 = scalar_lea.hbm %s4, %s453
          %s455 = sshll.u32 %s445, 4
          %s456 = int_to_ptr.vmem [resolvable:$true] %s455
          %461 = dma.vmem_to_hbm [thread:$0]  %s456, 1024, %s454, %s442, 128, 128, 8
        $region56: #{tpu_custom_call.1} parent=35 // pred_fallthru
          _
      $region36: #{tpu_custom_call.1} parent=5 // pred_fallthru
        _
      %p462 = scmp.le.s32.totalorder 2, %s17
      // Predicated region
      $region57: #{tpu_custom_call.1} parent=5 // pred_check
        %p463 = pneg %p462
      $region58: #{tpu_custom_call.1} parent=5 // pred_check_branch
        %465 = sbr.rel (%p463) target = $region60
      $region59: #{tpu_custom_call.1} parent=5 // pred_region
        %s466 = ssub.s32 %s17, 2
        // Predicated region
        $region61: #{tpu_custom_call.1} parent=59 // pred_check
          %p467 = pneg %p149
        $region62: #{tpu_custom_call.1} parent=59 // pred_check_branch
          %469 = sbr.rel (%p467) target = $region64
        $region63: #{tpu_custom_call.1} parent=59 // pred_region
          %s470 = sand.u32 %s134, 1
          %s471 = scalar_lea.sflag [#allocation5], %s470
          %s472 = sand.u32 %s134, 1
          %s473 = smul.addr %s472, 64
          %s474 = scalar_lea.vmem [#allocation8], %s473
          %475 = dma.done %s471, 1024
        $region64: #{tpu_custom_call.1} parent=59 // pred_fallthru
          _
      $region60: #{tpu_custom_call.1} parent=5 // pred_fallthru
        _
    $region6: #{tpu_custom_call.1} parent=1 // loop_footer
      %s21 = sadd.s32 1, %s17
    $region7: #{tpu_custom_call.1} parent=1 // loop_footer_branch
      %16 = sbr.rel target = $region3
    $region8: #{tpu_custom_call.1} parent=1 // loop_exit
      _
    %476 = vsyncpa [#allocation4], 1
    %s477 = scalar_lea.sflag [#allocation4], 1
    %478 = vsyncpa %s477, 1
    %479 = vsyncpa [#allocation5], 1
    %s480 = scalar_lea.sflag [#allocation5], 1
    %481 = vsyncpa %s480, 1
    %482 = vsyncpa [#allocation6], 1
    %s483 = scalar_lea.sflag [#allocation6], 1
    %484 = vsyncpa %s483, 1

</llo_original>
